<compile_context>
chip_gen: v5e
topology: v5e:2x2
jax: 0.10.0
libtpu: 0.0.40
codegen_flags: <defaults>
</compile_context>

<pallas_src>
import math

import jax
import jax.numpy as jnp
from jax.experimental import pallas as pl
from jax.experimental.pallas import tpu as pltpu


def fused_ff_kernel(vis_ref, aud_ref, w_vis_ref, w_aud_ref, b_ref, out_ref):
    # Two bf16 matmuls, f32 accumulation, single fused store (one vst chain).
    acc = jnp.dot(vis_ref[...], w_vis_ref[...], preferred_element_type=jnp.float32)
    acc = acc + jnp.dot(aud_ref[...], w_aud_ref[...],
                        preferred_element_type=jnp.float32)
    out_ref[...] = (acc + b_ref[...]).astype(out_ref.dtype)


def _round_up(x, m):
    return ((x + m - 1) // m) * m


def fold_params(p):
    """Exact offline folding of the affine chain (computed in f32)."""
    w_vis = p["wvp"] @ p["wf1"]
    w_aud = p["wap"] @ p["wv"] @ p["wo"] @ p["wf2"]
    b_out = (p["bvp"] @ p["wf1"]
             + ((p["bap"] @ p["wv"] + p["bv"]) @ p["wo"] + p["bo"]) @ p["wf2"]
             + p["bf"])
    # bf16 weights for the MXU / halved DMA; keep the bias in f32.
    return (w_vis.astype(jnp.bfloat16),
            w_aud.astype(jnp.bfloat16),
            b_out.astype(jnp.float32))


def feature_fusion(visual, audio, params, *, tile_b=256):
    batch, visual_dim = visual.shape
    audio_dim = audio.shape[1]
    fusion_dim = params["wvp"].shape[1]

    w_vis, w_aud, b_out = fold_params(params)

    # Batch tiling: up to `tile_b` rows per grid step (multiple of 8 sublanes);
    # pad the batch so the grid covers it exactly.  Weight index_maps are
    # constant so the folded weights stay VMEM-resident across grid steps.
    tb = min(tile_b, _round_up(max(batch, 1), 8))
    padded = _round_up(batch, tb)
    if padded != batch:
        pad = ((0, padded - batch), (0, 0))
        visual = jnp.pad(visual, pad)
        audio = jnp.pad(audio, pad)
    visual = visual.astype(jnp.bfloat16)   # bf16 MXU operands
    audio = audio.astype(jnp.bfloat16)

    grid = (padded // tb,)
    out = pl.pallas_call(
        fused_ff_kernel,
        out_shape=jax.ShapeDtypeStruct((padded, fusion_dim), jnp.float32),
        grid_spec=pltpu.PrefetchScalarGridSpec(
            num_scalar_prefetch=0,
            grid=grid,
            in_specs=[
                pl.BlockSpec((tb, visual_dim), lambda i: (i, 0)),
                pl.BlockSpec((tb, audio_dim), lambda i: (i, 0)),
                pl.BlockSpec((visual_dim, fusion_dim), lambda i: (0, 0)),
                pl.BlockSpec((audio_dim, fusion_dim), lambda i: (0, 0)),
                pl.BlockSpec((1, fusion_dim), lambda i: (0, 0)),
            ],
            out_specs=pl.BlockSpec((tb, fusion_dim), lambda i: (i, 0)),
        ),
        compiler_params=pltpu.CompilerParams(
            dimension_semantics=("parallel",)),
    )(visual, audio, w_vis, w_aud, b_out)
    return out[:batch]


def init_params(key, visual_dim, audio_dim, fusion_dim):
    """PyTorch-style uniform(+/- 1/sqrt(fan_in)) init of the module parameters.

    The attention q/k in_proj slices are not generated: with query/key sequence
    length 1 the softmax is identically 1, so q/k never influence the output.
    """
    def linear(k, din, dout):
        kw, kb = jax.random.split(k)
        bound = 1.0 / math.sqrt(din)
        w = jax.random.uniform(kw, (din, dout), jnp.float32, -bound, bound)
        b = jax.random.uniform(kb, (1, dout), jnp.float32, -bound, bound)
        return w, b

    ks = jax.random.split(key, 5)
    p = {}
    p["wvp"], p["bvp"] = linear(ks[0], visual_dim, fusion_dim)   # visual_proj
    p["wap"], p["bap"] = linear(ks[1], audio_dim, fusion_dim)    # audio_proj
    p["wv"], p["bv"] = linear(ks[2], fusion_dim, fusion_dim)     # attn in_proj (value)
    p["wo"], p["bo"] = linear(ks[3], fusion_dim, fusion_dim)     # attn out_proj
    wfc, bfc = linear(ks[4], 2 * fusion_dim, fusion_dim)         # fusion_fc (split on concat axis)
    p["wf1"], p["wf2"], p["bf"] = wfc[:fusion_dim], wfc[fusion_dim:], bfc
    return p


def reference(visual, audio, p):
    """Plain-JAX f32 reference of the PyTorch forward (unfolded chain).

    Softmax over a single key is identically 1, so
    attn_output == out_proj(value_proj(audio_proj(audio)))."""
    vf = visual @ p["wvp"] + p["bvp"]
    af = audio @ p["wap"] + p["bap"]
    attn_out = (af @ p["wv"] + p["bv"]) @ p["wo"] + p["bo"]
    return vf @ p["wf1"] + attn_out @ p["wf2"] + p["bf"]


if __name__ == "__main__":
    # Small shapes consistent with the module (scaled-down dims); batch chosen
    # to exercise both the padding path and a multi-step batch grid.
    BATCH, VISUAL_DIM, AUDIO_DIM, FUSION_DIM = 260, 256, 128, 128

    key = jax.random.PRNGKey(0)
    k_vis, k_aud, k_par = jax.random.split(key, 3)
    visual = jax.random.normal(k_vis, (BATCH, VISUAL_DIM), jnp.float32)
    audio = jax.random.normal(k_aud, (BATCH, AUDIO_DIM), jnp.float32)
    params = init_params(k_par, VISUAL_DIM, AUDIO_DIM, FUSION_DIM)

    out = feature_fusion(visual, audio, params, tile_b=256)
    out = jax.block_until_ready(out)

    ref = reference(visual, audio, params)
    assert out.shape == (BATCH, FUSION_DIM)
    assert jnp.allclose(out, ref, rtol=3e-2, atol=3e-2), "mismatch vs reference"
    print("KERNEL_OK")
</pallas_src>

<mosaic_0001>
module attributes {stable_mosaic.version = 11 : i64} {
  func.func @fused_ff_kernel(%arg0: i32, %arg1: memref<256x256xbf16, #tpu.memory_space<vmem>>, %arg2: memref<256x128xbf16, #tpu.memory_space<vmem>>, %arg3: memref<256x128xbf16, #tpu.memory_space<vmem>>, %arg4: memref<128x128xbf16, #tpu.memory_space<vmem>>, %arg5: memref<1x128xf32, #tpu.memory_space<vmem>>, %arg6: memref<256x128xf32, #tpu.memory_space<vmem>>) attributes {dimension_semantics = [#tpu.dimension_semantics<parallel>], iteration_bounds = array<i64: 2>, scalar_prefetch = 0 : i64, scratch_operands = 0 : i64, tpu.core_type = #tpu.core_type<tc>, window_params = [{transform_indices = @transform_0, window_bounds = array<i64: 256, 256>}, {transform_indices = @transform_1, window_bounds = array<i64: 256, 128>}, {pipeline_mode = #tpu.pipeline_mode<synchronous>, transform_indices = @transform_2, window_bounds = array<i64: 256, 128>}, {pipeline_mode = #tpu.pipeline_mode<synchronous>, transform_indices = @transform_3, window_bounds = array<i64: 128, 128>}, {pipeline_mode = #tpu.pipeline_mode<synchronous>, transform_indices = @transform_4, window_bounds = array<i64: 1, 128>}, {transform_indices = @transform_5, window_bounds = array<i64: 256, 128>}]} {
    %c0 = arith.constant 0 : index
    %c0_0 = arith.constant 0 : index
    %0 = vector.load %arg1[%c0, %c0_0] : memref<256x256xbf16, #tpu.memory_space<vmem>>, vector<256x256xbf16>
    %c0_1 = arith.constant 0 : index
    %c0_2 = arith.constant 0 : index
    %1 = vector.load %arg3[%c0_1, %c0_2] : memref<256x128xbf16, #tpu.memory_space<vmem>>, vector<256x128xbf16>
    %cst = arith.constant dense<0.000000e+00> : vector<256x128xf32>
    %2 = tpu.matmul %0, %1, %cst {dimension_numbers = #tpu.dot_dimension_numbers<[1], [0], [0], [1], [0, 0, 1, 1], [], []>} : vector<256x256xbf16>, vector<256x128xbf16>, vector<256x128xf32> -> vector<256x128xf32>
    %c0_3 = arith.constant 0 : index
    %c0_4 = arith.constant 0 : index
    %3 = vector.load %arg2[%c0_3, %c0_4] : memref<256x128xbf16, #tpu.memory_space<vmem>>, vector<256x128xbf16>
    %c0_5 = arith.constant 0 : index
    %c0_6 = arith.constant 0 : index
    %4 = vector.load %arg4[%c0_5, %c0_6] : memref<128x128xbf16, #tpu.memory_space<vmem>>, vector<128x128xbf16>
    %cst_7 = arith.constant dense<0.000000e+00> : vector<256x128xf32>
    %5 = tpu.matmul %3, %4, %cst_7 {dimension_numbers = #tpu.dot_dimension_numbers<[1], [0], [0], [1], [0, 0, 1, 1], [], []>} : vector<256x128xbf16>, vector<128x128xbf16>, vector<256x128xf32> -> vector<256x128xf32>
    %6 = arith.addf %2, %5 : vector<256x128xf32>
    %c0_8 = arith.constant 0 : index
    %c0_9 = arith.constant 0 : index
    %7 = vector.load %arg5[%c0_8, %c0_9] : memref<1x128xf32, #tpu.memory_space<vmem>>, vector<1x128xf32>
    %8 = vector.broadcast %7 : vector<1x128xf32> to vector<256x128xf32>
    %9 = arith.addf %6, %8 : vector<256x128xf32>
    %c0_10 = arith.constant 0 : index
    %c0_11 = arith.constant 0 : index
    %10 = vector.load %arg6[%c0_10, %c0_11] : memref<256x128xf32, #tpu.memory_space<vmem>>, vector<256x128xf32>
    tpu.vector_store %arg6[%c0_10, %c0_11], %9 {strides = array<i32>} : memref<256x128xf32, #tpu.memory_space<vmem>>, vector<256x128xf32>,
    return
  }
  func.func @transform_0(%arg0: i32) -> (i32, i32) {
    %c0_i32 = arith.constant 0 : i32
    %c0_i32_0 = arith.constant 0 : i32
    return %arg0, %c0_i32 : i32, i32
  }
  func.func @transform_1(%arg0: i32) -> (i32, i32) {
    %c0_i32 = arith.constant 0 : i32
    %c0_i32_0 = arith.constant 0 : i32
    return %arg0, %c0_i32 : i32, i32
  }
  func.func @transform_2(%arg0: i32) -> (i32, i32) {
    %c0_i32 = arith.constant 0 : i32
    %c0_i32_0 = arith.constant 0 : i32
    %c0_i32_1 = arith.constant 0 : i32
    return %c0_i32, %c0_i32_0 : i32, i32
  }
  func.func @transform_3(%arg0: i32) -> (i32, i32) {
    %c0_i32 = arith.constant 0 : i32
    %c0_i32_0 = arith.constant 0 : i32
    %c0_i32_1 = arith.constant 0 : i32
    return %c0_i32, %c0_i32_0 : i32, i32
  }
  func.func @transform_4(%arg0: i32) -> (i32, i32) {
    %c0_i32 = arith.constant 0 : i32
    %c0_i32_0 = arith.constant 0 : i32
    %c0_i32_1 = arith.constant 0 : i32
    return %c0_i32, %c0_i32_0 : i32, i32
  }
  func.func @transform_5(%arg0: i32) -> (i32, i32) {
    %c0_i32 = arith.constant 0 : i32
    %c0_i32_0 = arith.constant 0 : i32
    return %arg0, %c0_i32 : i32, i32
  }
}

</mosaic_0001>

<llo_original>
// kernel: tpu_custom_call.1
$region0: #{tpu_custom_call.1}
  #allocation0 [shape = 'u32[]', space=smem, size = 0x4, offset = 0x4, fixed_abs, tag = 'smem constant byte address 0x4 - core index']
  #allocation1 [shape = 'u32[72,128]{1,0:T(1,128)}', space=vmem, size = 0x9000, scoped, tag = 'internal scratch']
  %s0 = inlined_call_operand.hbm [shape: bf16[512,256], index: 0, kind: input, shape index: {}]
  %s1 = inlined_call_operand.hbm [shape: bf16[512,128], index: 1, kind: input, shape index: {}]
  %s2 = inlined_call_operand.hbm [shape: bf16[256,128], index: 2, kind: input, shape index: {}]
  %s3 = inlined_call_operand.hbm [shape: bf16[128,128], index: 3, kind: input, shape index: {}]
  %s4 = inlined_call_operand.vmem [shape: f32[1,128], index: 4, kind: input, shape index: {}]
  %s5 = inlined_call_operand.hbm [shape: f32[512,128], index: 5, kind: output, shape index: {}]
  %s6 = sld [smem:[#allocation0]]
  $region69: #{tpu_custom_call.1} parent=0
    _
  %s8 = ssub.s32 1, %s6
  %s9 = scalar_select 0, %s8, %s6
  $region1: #{tpu_custom_call.1} parent=0
    #allocation2 [shape = 'u8[262144]{0}', space=vmem, size = 0x40000, scoped, tag = 'input window, operand 0']
    #allocation3 [shape = 's32[2]{0}', space=sflag, size = 0x8, scoped, tag = 'scoped memory for tpu_custom_call.1']
    #allocation4 [shape = 's32[2]{0}', space=sflag, size = 0x8, scoped, tag = 'scoped memory for tpu_custom_call.1']
    #allocation5 [shape = 'u8[131072]{0}', space=vmem, size = 0x20000, scoped, tag = 'input window, operand 1']
    #allocation6 [shape = 's32[2]{0}', space=sflag, size = 0x8, scoped, tag = 'scoped memory for tpu_custom_call.1']
    #allocation7 [shape = 'u8[65536]{0}', space=vmem, size = 0x10000, scoped, tag = 'input window, operand 2, single buffered']
    #allocation8 [shape = 'u8[32768]{0}', space=vmem, size = 0x8000, scoped, tag = 'input window, operand 3, single buffered']
    #allocation9 [shape = 's32[1]{0}', space=sflag, size = 0x4, scoped, tag = 'scoped memory for tpu_custom_call.1']
    #allocation10 [shape = 'u8[262144]{0}', space=vmem, size = 0x40000, scoped, tag = 'output window, operand 0']
    %10 = vsyncpa [#allocation3], 0
    %s11 = scalar_lea.sflag [#allocation3], 1
    %12 = vsyncpa %s11, 0
    %13 = vsyncpa [#allocation6], 0
    %s14 = scalar_lea.sflag [#allocation6], 1
    %15 = vsyncpa %s14, 0
    %16 = vsyncpa [#allocation9], 0
    %17 = vsyncpa [#allocation4], 0
    %s18 = scalar_lea.sflag [#allocation4], 1
    %19 = vsyncpa %s18, 0
    loop: start=0, step=1, limit=4
    $region2: #{tpu_custom_call.1} parent=1 // loop_pre_header
      _
    $region3: #{tpu_custom_call.1} parent=1 // loop_header
      %s21 = sphi 0, %s25
      %p22 = scmp.ge.s32.totalorder %s21, 4
      %s31 = sphi 0, %s33
      %s34 = sphi 0, %s31
      %s35 = sphi 0, %s34
      %s51 = sphi 0, %s35
      %s57 = sphi 0, %s59
      %s60 = sphi 0, %s57
      %s61 = sphi 0, %s60
      %s77 = sphi 0, %s61
      %s81 = sphi 0, %s81
      %s83 = sphi 0, %s81
      %s84 = sphi 0, %s83
      %s98 = sphi 0, %s84
      %s102 = sphi 0, %s102
      %s104 = sphi 0, %s102
      %s105 = sphi 0, %s104
      %s119 = sphi 0, %s105
      %s123 = sphi 0, %s123
      %s125 = sphi 0, %s123
      %s126 = sphi 0, %s125
      %s140 = sphi 0, %s126
      %s146 = sphi 0, %s148
      %s149 = sphi 0, %s146
      %s150 = sphi 0, %s149
      %s166 = sphi 0, %s150
    $region4: #{tpu_custom_call.1} parent=1 // loop_header_branch
      %24 = sbr.rel (%p22) target = $region8
    $region5: #{tpu_custom_call.1} parent=1 // loop_body
      %s26 = ssub.s32 %s21, 1
      %s27 = ssub.s32 %s21, 2
      %s28 = sadd.s32 %s21, 1
      %s29 = ssub.s32 %s21, %s28
      %p30 = scmp.eq.s32.totalorder %s29, 0
      %s32 = sadd.s32 %s31, 1
      %s33 = scalar_select %p30, %s31, %s32
      %p36 = pneg %p30
      %p37 = scmp.eq.s32.totalorder %s21, 1
      %p38 = por %p36, %p37
      %p39 = scmp.ne.s32.totalorder %s31, %s34
      %p40 = scmp.eq.s32.totalorder %s21, 0
      %p41 = por %p39, %p40
      %p42 = scmp.ne.s32.totalorder %s31, %s34
      %p43 = scmp.eq.s32.totalorder %s26, 1
      %p44 = por %p42, %p43
      %p45 = scmp.ne.s32.totalorder %s34, %s35
      %p46 = scmp.eq.s32.totalorder %s26, 0
      %p47 = por %p45, %p46
      %p48 = scmp.ne.s32.totalorder %s34, %s35
      %p49 = scmp.eq.s32.totalorder %s27, 1
      %p50 = por %p48, %p49
      %p52 = scmp.ne.s32.totalorder %s35, %s51
      %p53 = scmp.eq.s32.totalorder %s27, 0
      %p54 = por %p52, %p53
      %s55 = ssub.s32 %s21, %s28
      %p56 = scmp.eq.s32.totalorder %s55, 0
      %s58 = sadd.s32 %s57, 1
      %s59 = scalar_select %p56, %s57, %s58
      %p62 = pneg %p56
      %p63 = scmp.eq.s32.totalorder %s21, 1
      %p64 = por %p62, %p63
      %p65 = scmp.ne.s32.totalorder %s57, %s60
      %p66 = scmp.eq.s32.totalorder %s21, 0
      %p67 = por %p65, %p66
      %p68 = scmp.ne.s32.totalorder %s57, %s60
      %p69 = scmp.eq.s32.totalorder %s26, 1
      %p70 = por %p68, %p69
      %p71 = scmp.ne.s32.totalorder %s60, %s61
      %p72 = scmp.eq.s32.totalorder %s26, 0
      %p73 = por %p71, %p72
      %p74 = scmp.ne.s32.totalorder %s60, %s61
      %p75 = scmp.eq.s32.totalorder %s27, 1
      %p76 = por %p74, %p75
      %p78 = scmp.ne.s32.totalorder %s61, %s77
      %p79 = scmp.eq.s32.totalorder %s27, 0
      %p80 = por %p78, %p79
      %s82 = sadd.s32 %s81, 1
      %p85 = scmp.eq.s32.totalorder %s21, 1
      %p86 = scmp.ne.s32.totalorder %s81, %s83
      %p87 = scmp.eq.s32.totalorder %s21, 0
      %p88 = por %p86, %p87
      %p89 = scmp.ne.s32.totalorder %s81, %s83
      %p90 = scmp.eq.s32.totalorder %s26, 1
      %p91 = por %p89, %p90
      %p92 = scmp.ne.s32.totalorder %s83, %s84
      %p93 = scmp.eq.s32.totalorder %s26, 0
      %p94 = por %p92, %p93
      %p95 = scmp.ne.s32.totalorder %s83, %s84
      %p96 = scmp.eq.s32.totalorder %s27, 1
      %p97 = por %p95, %p96
      %p99 = scmp.ne.s32.totalorder %s84, %s98
      %p100 = scmp.eq.s32.totalorder %s27, 0
      %p101 = por %p99, %p100
      %s103 = sadd.s32 %s102, 1
      %p106 = scmp.eq.s32.totalorder %s21, 1
      %p107 = scmp.ne.s32.totalorder %s102, %s104
      %p108 = scmp.eq.s32.totalorder %s21, 0
      %p109 = por %p107, %p108
      %p110 = scmp.ne.s32.totalorder %s102, %s104
      %p111 = scmp.eq.s32.totalorder %s26, 1
      %p112 = por %p110, %p111
      %p113 = scmp.ne.s32.totalorder %s104, %s105
      %p114 = scmp.eq.s32.totalorder %s26, 0
      %p115 = por %p113, %p114
      %p116 = scmp.ne.s32.totalorder %s104, %s105
      %p117 = scmp.eq.s32.totalorder %s27, 1
      %p118 = por %p116, %p117
      %p120 = scmp.ne.s32.totalorder %s105, %s119
      %p121 = scmp.eq.s32.totalorder %s27, 0
      %p122 = por %p120, %p121
      %s124 = sadd.s32 %s123, 1
      %p127 = scmp.eq.s32.totalorder %s21, 1
      %p128 = scmp.ne.s32.totalorder %s123, %s125
      %p129 = scmp.eq.s32.totalorder %s21, 0
      %p130 = por %p128, %p129
      %p131 = scmp.ne.s32.totalorder %s123, %s125
      %p132 = scmp.eq.s32.totalorder %s26, 1
      %p133 = por %p131, %p132
      %p134 = scmp.ne.s32.totalorder %s125, %s126
      %p135 = scmp.eq.s32.totalorder %s26, 0
      %p136 = por %p134, %p135
      %p137 = scmp.ne.s32.totalorder %s125, %s126
      %p138 = scmp.eq.s32.totalorder %s27, 1
      %p139 = por %p137, %p138
      %p141 = scmp.ne.s32.totalorder %s126, %s140
      %p142 = scmp.eq.s32.totalorder %s27, 0
      %p143 = por %p141, %p142
      %s144 = ssub.s32 %s21, %s28
      %p145 = scmp.eq.s32.totalorder %s144, 0
      %s147 = sadd.s32 %s146, 1
      %s148 = scalar_select %p145, %s146, %s147
      %p151 = pneg %p145
      %p152 = scmp.eq.s32.totalorder %s21, 1
      %p153 = por %p151, %p152
      %p154 = scmp.ne.s32.totalorder %s146, %s149
      %p155 = scmp.eq.s32.totalorder %s21, 0
      %p156 = por %p154, %p155
      %p157 = scmp.ne.s32.totalorder %s146, %s149
      %p158 = scmp.eq.s32.totalorder %s26, 1
      %p159 = por %p157, %p158
      %p160 = scmp.ne.s32.totalorder %s149, %s150
      %p161 = scmp.eq.s32.totalorder %s26, 0
      %p162 = por %p160, %p161
      %p163 = scmp.ne.s32.totalorder %s149, %s150
      %p164 = scmp.eq.s32.totalorder %s27, 1
      %p165 = por %p163, %p164
      %p167 = scmp.ne.s32.totalorder %s150, %s166
      %p168 = scmp.eq.s32.totalorder %s27, 0
      %p169 = por %p167, %p168
      %p170 = scmp.le.s32.totalorder 1, %s21
      %p171 = scmp.lt.s32.totalorder %s21, 3
      %p172 = pnand %p170, %p171
      %p173 = pneg %p172
      // Predicated region
      $region9: #{tpu_custom_call.1} parent=5 // pred_check
        _
      $region10: #{tpu_custom_call.1} parent=5 // pred_check_branch
        %175 = sbr.rel (%p172) target = $region12
      $region11: #{tpu_custom_call.1} parent=5 // pred_region
        %s176 = ssub.s32 %s21, 1
        // Predicated region
        $region13: #{tpu_custom_call.1} parent=11 // pred_check
          %p177 = pneg %p94
        $region14: #{tpu_custom_call.1} parent=11 // pred_check_branch
          %179 = sbr.rel (%p177) target = $region16
        $region15: #{tpu_custom_call.1} parent=11 // pred_region
          %181 = vsyncadd [#allocation6], 0
          %s182 = sshll.u32 %s2, 4
          %s183 = int_to_ptr.hbm [resolvable:$true] %s182
          %s184 = sshll.u32 [#allocation7], 4
          %s185 = int_to_ptr.vmem [resolvable:$true] %s184
          %190 = dma.hbm_to_vmem [thread:$0]  %s183, 2048, %s185, [#allocation6], 64, 64, 4
        $region16: #{tpu_custom_call.1} parent=11 // pred_fallthru
          _
        // Predicated region
        $region17: #{tpu_custom_call.1} parent=11 // pred_check
          %p191 = pneg %p115
        $region18: #{tpu_custom_call.1} parent=11 // pred_check_branch
          %193 = sbr.rel (%p191) target = $region20
        $region19: #{tpu_custom_call.1} parent=11 // pred_region
          %195 = vsyncadd [#allocation9], 0
          %s196 = sshll.u32 %s3, 4
          %s197 = int_to_ptr.hbm [resolvable:$true] %s196
          %s198 = sshll.u32 [#allocation8], 4
          %s199 = int_to_ptr.vmem [resolvable:$true] %s198
          %204 = dma.hbm_to_vmem [thread:$0]  %s197, 1024, %s199, [#allocation9], 64, 64, 4
        $region20: #{tpu_custom_call.1} parent=11 // pred_fallthru
          _
        // Predicated region
        $region21: #{tpu_custom_call.1} parent=11 // pred_check
          %p205 = pneg %p136
        $region22: #{tpu_custom_call.1} parent=11 // pred_check_branch
          %207 = sbr.rel (%p205) target = $region24
        $region23: #{tpu_custom_call.1} parent=11 // pred_region
          _
        $region24: #{tpu_custom_call.1} parent=11 // pred_fallthru
          _
      $region12: #{tpu_custom_call.1} parent=5 // pred_fallthru
        _
      %p208 = scmp.lt.s32.totalorder %s21, 2
      // Predicated region
      $region25: #{tpu_custom_call.1} parent=5 // pred_check
        %p209 = pneg %p208
      $region26: #{tpu_custom_call.1} parent=5 // pred_check_branch
        %211 = sbr.rel (%p209) target = $region28
      $region27: #{tpu_custom_call.1} parent=5 // pred_region
        // Predicated region
        $region29: #{tpu_custom_call.1} parent=27 // pred_check
          %p212 = pneg %p41
        $region30: #{tpu_custom_call.1} parent=27 // pred_check_branch
          %214 = sbr.rel (%p212) target = $region32
        $region31: #{tpu_custom_call.1} parent=27 // pred_region
          %s215 = sand.u32 %s31, 1
          %s216 = scalar_lea.sflag [#allocation3], %s215
          %s217 = sand.u32 %s31, 1
          %s218 = smul.addr %s217, 256
          %s219 = scalar_lea.vmem [#allocation2], %s218
          %s220 = smul.u32 32, %s21
          %222 = vsyncadd %s216, 0
          %s223 = smul.addr %s220, 2
          %s224 = smul.addr %s223, 4
          %s225 = scalar_lea.hbm %s0, %s224
          %s226 = sshll.u32 %s225, 4
          %s227 = int_to_ptr.hbm [resolvable:$true] %s226
          %s228 = sshll.u32 %s219, 4
          %s229 = int_to_ptr.vmem [resolvable:$true] %s228
          %234 = dma.hbm_to_vmem [thread:$0]  %s227, 4096, %s229, %s216, 128, 128, 8
        $region32: #{tpu_custom_call.1} parent=27 // pred_fallthru
          _
        // Predicated region
        $region33: #{tpu_custom_call.1} parent=27 // pred_check
          %p235 = pneg %p67
        $region34: #{tpu_custom_call.1} parent=27 // pred_check_branch
          %237 = sbr.rel (%p235) target = $region36
        $region35: #{tpu_custom_call.1} parent=27 // pred_region
          %s238 = sand.u32 %s21, 1
          %s239 = scalar_lea.sflag [#allocation6], %s238
          %s240 = sand.u32 %s57, 1
          %s241 = smul.addr %s240, 128
          %s242 = scalar_lea.vmem [#allocation5], %s241
          %s243 = smul.u32 32, %s21
          %245 = vsyncadd %s239, 0
          %s246 = smul.addr %s243, 4
          %s247 = scalar_lea.hbm %s1, %s246
          %s248 = sshll.u32 %s247, 4
          %s249 = int_to_ptr.hbm [resolvable:$true] %s248
          %s250 = sshll.u32 %s242, 4
          %s251 = int_to_ptr.vmem [resolvable:$true] %s250
          %256 = dma.hbm_to_vmem [thread:$0]  %s249, 2048, %s251, %s239, 64, 64, 4
        $region36: #{tpu_custom_call.1} parent=27 // pred_fallthru
          _
      $region28: #{tpu_custom_call.1} parent=5 // pred_fallthru
        _
      %p257 = scmp.le.s32.totalorder 1, %s21
      %p258 = scmp.lt.s32.totalorder %s21, 3
      %p259 = pnand %p257, %p258
      %p260 = pneg %p259
      // Predicated region
      $region37: #{tpu_custom_call.1} parent=5 // pred_check
        _
      $region38: #{tpu_custom_call.1} parent=5 // pred_check_branch
        %262 = sbr.rel (%p259) target = $region40
      $region39: #{tpu_custom_call.1} parent=5 // pred_region
        %s263 = ssub.s32 %s21, 1
        %s264 = sand.u32 %s34, 1
        %s265 = scalar_lea.sflag [#allocation3], %s264
        %s266 = sand.u32 %s34, 1
        %s267 = smul.addr %s266, 256
        %s268 = scalar_lea.vmem [#allocation2], %s267
        // Predicated region
        $region41: #{tpu_custom_call.1} parent=39 // pred_check
          %p269 = pneg %p47
        $region42: #{tpu_custom_call.1} parent=39 // pred_check_branch
          %271 = sbr.rel (%p269) target = $region44
        $region43: #{tpu_custom_call.1} parent=39 // pred_region
          %273 = dma.done %s265, 4096
        $region44: #{tpu_custom_call.1} parent=39 // pred_fallthru
          _
        %s274 = sand.u32 %s26, 1
        %s275 = scalar_lea.sflag [#allocation6], %s274
        %s276 = sand.u32 %s60, 1
        %s277 = smul.addr %s276, 128
        %s278 = scalar_lea.vmem [#allocation5], %s277
        // Predicated region
        $region45: #{tpu_custom_call.1} parent=39 // pred_check
          %p279 = pneg %p73
        $region46: #{tpu_custom_call.1} parent=39 // pred_check_branch
          %281 = sbr.rel (%p279) target = $region48
        $region47: #{tpu_custom_call.1} parent=39 // pred_region
          %283 = dma.done %s275, 2048
        $region48: #{tpu_custom_call.1} parent=39 // pred_fallthru
          _
        // Predicated region
        $region49: #{tpu_custom_call.1} parent=39 // pred_check
          %p284 = pneg %p94
        $region50: #{tpu_custom_call.1} parent=39 // pred_check_branch
          %286 = sbr.rel (%p284) target = $region52
        $region51: #{tpu_custom_call.1} parent=39 // pred_region
          %288 = dma.done [#allocation6], 2048
        $region52: #{tpu_custom_call.1} parent=39 // pred_fallthru
          _
        // Predicated region
        $region53: #{tpu_custom_call.1} parent=39 // pred_check
          %p289 = pneg %p115
        $region54: #{tpu_custom_call.1} parent=39 // pred_check_branch
          %291 = sbr.rel (%p289) target = $region56
        $region55: #{tpu_custom_call.1} parent=39 // pred_region
          %293 = dma.done [#allocation9], 1024
        $region56: #{tpu_custom_call.1} parent=39 // pred_fallthru
          _
        %s294 = sand.u32 %s34, 1
        %s295 = scalar_lea.sflag [#allocation3], %s294
        %s296 = sand.u32 %s34, 1
        %s297 = smul.addr %s296, 256
        %s298 = scalar_lea.vmem [#allocation2], %s297
        %p299 = pneg %p47
        %p300 = pneg %p44
        %s301 = sand.u32 %s26, 1
        %s302 = scalar_lea.sflag [#allocation6], %s301
        %s303 = sand.u32 %s60, 1
        %s304 = smul.addr %s303, 128
        %s305 = scalar_lea.vmem [#allocation5], %s304
        %p306 = pneg %p73
        %p307 = pneg %p70
        %p308 = pneg %p94
        %p309 = pneg %p91
        %p310 = pneg %p115
        %p311 = pneg %p112
        %p312 = pneg %p136
        %p313 = pneg %p133
        %p314 = pneg %p162
        %p315 = pneg %p159
        %s316 = sand.u32 %s149, 1
        %s317 = scalar_lea.sflag [#allocation4], %s316
        %s318 = sand.u32 %s149, 1
        %s319 = smul.addr %s318, 256
        %s320 = scalar_lea.vmem [#allocation10], %s319
        %s321 = smul.u32 32, %s26
        %s322 = smul.u32 32, %s26
        %s323 = smul.u32 32, %s26
        %v324 = vld [vmem:[%s268] sm:$0xff]
        %v325 = vld [vmem:[%s268 + $0x8] sm:$0xff]
        %v326 = vld [vmem:[%s268 + $0x10] sm:$0xff]
        %v327 = vld [vmem:[%s268 + $0x18] sm:$0xff]
        %v328 = vld [vmem:[%s268 + $0x20] sm:$0xff]
        %v329 = vld [vmem:[%s268 + $0x28] sm:$0xff]
        %v330 = vld [vmem:[%s268 + $0x30] sm:$0xff]
        %v331 = vld [vmem:[%s268 + $0x38] sm:$0xff]
        %v332 = vld [vmem:[%s268 + $0x40] sm:$0xff]
        %v333 = vld [vmem:[%s268 + $0x48] sm:$0xff]
        %v334 = vld [vmem:[%s268 + $0x50] sm:$0xff]
        %v335 = vld [vmem:[%s268 + $0x58] sm:$0xff]
        %v336 = vld [vmem:[%s268 + $0x60] sm:$0xff]
        %v337 = vld [vmem:[%s268 + $0x68] sm:$0xff]
        %v338 = vld [vmem:[%s268 + $0x70] sm:$0xff]
        %v339 = vld [vmem:[%s268 + $0x78] sm:$0xff]
        %v340 = vld [vmem:[%s268 + $0x80] sm:$0xff]
        %v341 = vld [vmem:[%s268 + $0x88] sm:$0xff]
        %v342 = vld [vmem:[%s268 + $0x90] sm:$0xff]
        %v343 = vld [vmem:[%s268 + $0x98] sm:$0xff]
        %v344 = vld [vmem:[%s268 + $0xa0] sm:$0xff]
        %v345 = vld [vmem:[%s268 + $0xa8] sm:$0xff]
        %v346 = vld [vmem:[%s268 + $0xb0] sm:$0xff]
        %v347 = vld [vmem:[%s268 + $0xb8] sm:$0xff]
        %v348 = vld [vmem:[%s268 + $0xc0] sm:$0xff]
        %v349 = vld [vmem:[%s268 + $0xc8] sm:$0xff]
        %v350 = vld [vmem:[%s268 + $0xd0] sm:$0xff]
        %v351 = vld [vmem:[%s268 + $0xd8] sm:$0xff]
        %v352 = vld [vmem:[%s268 + $0xe0] sm:$0xff]
        %v353 = vld [vmem:[%s268 + $0xe8] sm:$0xff]
        %v354 = vld [vmem:[%s268 + $0xf0] sm:$0xff]
        %v355 = vld [vmem:[%s268 + $0xf8] sm:$0xff]
        %v356 = vld [vmem:[#allocation7] sm:$0xf]
        %v357 = vld [vmem:[#allocation7 + $0x4] sm:$0xf]
        %v358 = vld [vmem:[#allocation7 + $0x8] sm:$0xf]
        %v359 = vld [vmem:[#allocation7 + $0xc] sm:$0xf]
        %v360 = vld [vmem:[#allocation7 + $0x10] sm:$0xf]
        %v361 = vld [vmem:[#allocation7 + $0x14] sm:$0xf]
        %v362 = vld [vmem:[#allocation7 + $0x18] sm:$0xf]
        %v363 = vld [vmem:[#allocation7 + $0x1c] sm:$0xf]
        %v364 = vld [vmem:[#allocation7 + $0x20] sm:$0xf]
        %v365 = vld [vmem:[#allocation7 + $0x24] sm:$0xf]
        %v366 = vld [vmem:[#allocation7 + $0x28] sm:$0xf]
        %v367 = vld [vmem:[#allocation7 + $0x2c] sm:$0xf]
        %v368 = vld [vmem:[#allocation7 + $0x30] sm:$0xf]
        %v369 = vld [vmem:[#allocation7 + $0x34] sm:$0xf]
        %v370 = vld [vmem:[#allocation7 + $0x38] sm:$0xf]
        %v371 = vld [vmem:[#allocation7 + $0x3c] sm:$0xf]
        %v372 = vld [vmem:[#allocation7 + $0x40] sm:$0xf]
        %v373 = vld [vmem:[#allocation7 + $0x44] sm:$0xf]
        %v374 = vld [vmem:[#allocation7 + $0x48] sm:$0xf]
        %v375 = vld [vmem:[#allocation7 + $0x4c] sm:$0xf]
        %v376 = vld [vmem:[#allocation7 + $0x50] sm:$0xf]
        %v377 = vld [vmem:[#allocation7 + $0x54] sm:$0xf]
        %v378 = vld [vmem:[#allocation7 + $0x58] sm:$0xf]
        %v379 = vld [vmem:[#allocation7 + $0x5c] sm:$0xf]
        %v380 = vld [vmem:[#allocation7 + $0x60] sm:$0xf]
        %v381 = vld [vmem:[#allocation7 + $0x64] sm:$0xf]
        %v382 = vld [vmem:[#allocation7 + $0x68] sm:$0xf]
        %v383 = vld [vmem:[#allocation7 + $0x6c] sm:$0xf]
        %v384 = vld [vmem:[#allocation7 + $0x70] sm:$0xf]
        %v385 = vld [vmem:[#allocation7 + $0x74] sm:$0xf]
        %v386 = vld [vmem:[#allocation7 + $0x78] sm:$0xf]
        %v387 = vld [vmem:[#allocation7 + $0x7c] sm:$0xf]
        %v388 = vld [vmem:[%s278] sm:$0xf]
        %v389 = vld [vmem:[%s278 + $0x4] sm:$0xf]
        %v390 = vld [vmem:[%s278 + $0x8] sm:$0xf]
        %v391 = vld [vmem:[%s278 + $0xc] sm:$0xf]
        %v392 = vld [vmem:[%s278 + $0x10] sm:$0xf]
        %v393 = vld [vmem:[%s278 + $0x14] sm:$0xf]
        %v394 = vld [vmem:[%s278 + $0x18] sm:$0xf]
        %v395 = vld [vmem:[%s278 + $0x1c] sm:$0xf]
        %v396 = vld [vmem:[%s278 + $0x20] sm:$0xf]
        %v397 = vld [vmem:[%s278 + $0x24] sm:$0xf]
        %v398 = vld [vmem:[%s278 + $0x28] sm:$0xf]
        %v399 = vld [vmem:[%s278 + $0x2c] sm:$0xf]
        %v400 = vld [vmem:[%s278 + $0x30] sm:$0xf]
        %v401 = vld [vmem:[%s278 + $0x34] sm:$0xf]
        %v402 = vld [vmem:[%s278 + $0x38] sm:$0xf]
        %v403 = vld [vmem:[%s278 + $0x3c] sm:$0xf]
        %v404 = vld [vmem:[%s278 + $0x40] sm:$0xf]
        %v405 = vld [vmem:[%s278 + $0x44] sm:$0xf]
        %v406 = vld [vmem:[%s278 + $0x48] sm:$0xf]
        %v407 = vld [vmem:[%s278 + $0x4c] sm:$0xf]
        %v408 = vld [vmem:[%s278 + $0x50] sm:$0xf]
        %v409 = vld [vmem:[%s278 + $0x54] sm:$0xf]
        %v410 = vld [vmem:[%s278 + $0x58] sm:$0xf]
        %v411 = vld [vmem:[%s278 + $0x5c] sm:$0xf]
        %v412 = vld [vmem:[%s278 + $0x60] sm:$0xf]
        %v413 = vld [vmem:[%s278 + $0x64] sm:$0xf]
        %v414 = vld [vmem:[%s278 + $0x68] sm:$0xf]
        %v415 = vld [vmem:[%s278 + $0x6c] sm:$0xf]
        %v416 = vld [vmem:[%s278 + $0x70] sm:$0xf]
        %v417 = vld [vmem:[%s278 + $0x74] sm:$0xf]
        %v418 = vld [vmem:[%s278 + $0x78] sm:$0xf]
        %v419 = vld [vmem:[%s278 + $0x7c] sm:$0xf]
        %v420 = vld [vmem:[#allocation8] sm:$0xf]
        %v421 = vld [vmem:[#allocation8 + $0x4] sm:$0xf]
        %v422 = vld [vmem:[#allocation8 + $0x8] sm:$0xf]
        %v423 = vld [vmem:[#allocation8 + $0xc] sm:$0xf]
        %v424 = vld [vmem:[#allocation8 + $0x10] sm:$0xf]
        %v425 = vld [vmem:[#allocation8 + $0x14] sm:$0xf]
        %v426 = vld [vmem:[#allocation8 + $0x18] sm:$0xf]
        %v427 = vld [vmem:[#allocation8 + $0x1c] sm:$0xf]
        %v428 = vld [vmem:[#allocation8 + $0x20] sm:$0xf]
        %v429 = vld [vmem:[#allocation8 + $0x24] sm:$0xf]
        %v430 = vld [vmem:[#allocation8 + $0x28] sm:$0xf]
        %v431 = vld [vmem:[#allocation8 + $0x2c] sm:$0xf]
        %v432 = vld [vmem:[#allocation8 + $0x30] sm:$0xf]
        %v433 = vld [vmem:[#allocation8 + $0x34] sm:$0xf]
        %v434 = vld [vmem:[#allocation8 + $0x38] sm:$0xf]
        %v435 = vld [vmem:[#allocation8 + $0x3c] sm:$0xf]
        %v468 = vunpack.c.l.b16 %v388
        %v469 = vunpack.c.l.b16 %v389
        %v470 = vunpack.c.l.b16 %v390
        %v471 = vunpack.c.l.b16 %v391
        %v472 = vunpack.c.l.b16 %v392
        %v473 = vunpack.c.l.b16 %v393
        %v474 = vunpack.c.l.b16 %v394
        %v475 = vunpack.c.l.b16 %v395
        %v476 = vunpack.c.l.b16 %v396
        %v477 = vunpack.c.l.b16 %v397
        %v478 = vunpack.c.l.b16 %v398
        %v479 = vunpack.c.l.b16 %v399
        %v480 = vunpack.c.l.b16 %v400
        %v481 = vunpack.c.l.b16 %v401
        %v482 = vunpack.c.l.b16 %v402
        %v483 = vunpack.c.l.b16 %v403
        %v484 = vunpack.c.l.b16 %v404
        %v485 = vunpack.c.l.b16 %v405
        %v486 = vunpack.c.l.b16 %v406
        %v487 = vunpack.c.l.b16 %v407
        %v488 = vunpack.c.l.b16 %v408
        %v489 = vunpack.c.l.b16 %v409
        %v490 = vunpack.c.l.b16 %v410
        %v491 = vunpack.c.l.b16 %v411
        %v492 = vunpack.c.l.b16 %v412
        %v493 = vunpack.c.l.b16 %v413
        %v494 = vunpack.c.l.b16 %v414
        %v495 = vunpack.c.l.b16 %v415
        %v496 = vunpack.c.l.b16 %v416
        %v497 = vunpack.c.l.b16 %v417
        %v498 = vunpack.c.l.b16 %v418
        %v499 = vunpack.c.l.b16 %v419
        %v500 = vpack.c.b16 %v469, %v468
        %v501 = vpack.c.b16 %v471, %v470
        %v502 = vpack.c.b16 %v473, %v472
        %v503 = vpack.c.b16 %v475, %v474
        %v504 = vpack.c.b16 %v477, %v476
        %v505 = vpack.c.b16 %v479, %v478
        %v506 = vpack.c.b16 %v481, %v480
        %v507 = vpack.c.b16 %v483, %v482
        %v508 = vpack.c.b16 %v485, %v484
        %v509 = vpack.c.b16 %v487, %v486
        %v510 = vpack.c.b16 %v489, %v488
        %v511 = vpack.c.b16 %v491, %v490
        %v512 = vpack.c.b16 %v493, %v492
        %v513 = vpack.c.b16 %v495, %v494
        %v514 = vpack.c.b16 %v497, %v496
        %v515 = vpack.c.b16 %v499, %v498
        %v548 = vunpack.c.l.b16 %v420
        %v549 = vunpack.c.l.b16 %v421
        %v550 = vunpack.c.l.b16 %v422
        %v551 = vunpack.c.l.b16 %v423
        %v552 = vunpack.c.l.b16 %v424
        %v553 = vunpack.c.l.b16 %v425
        %v554 = vunpack.c.l.b16 %v426
        %v555 = vunpack.c.l.b16 %v427
        %v556 = vunpack.c.l.b16 %v428
        %v557 = vunpack.c.l.b16 %v429
        %v558 = vunpack.c.l.b16 %v430
        %v559 = vunpack.c.l.b16 %v431
        %v560 = vunpack.c.l.b16 %v432
        %v561 = vunpack.c.l.b16 %v433
        %v562 = vunpack.c.l.b16 %v434
        %v563 = vunpack.c.l.b16 %v435
        %v564 = vpack.c.b16 %v549, %v548
        %v565 = vpack.c.b16 %v551, %v550
        %v566 = vpack.c.b16 %v553, %v552
        %v567 = vpack.c.b16 %v555, %v554
        %v568 = vpack.c.b16 %v557, %v556
        %v569 = vpack.c.b16 %v559, %v558
        %v570 = vpack.c.b16 %v561, %v560
        %v571 = vpack.c.b16 %v563, %v562
        %580 = vmatpush.bf16.msra.mxu0 %v571
        %581 = vmatpush.bf16.msra.mxu0 %v570
        %582 = vmatpush.bf16.msra.mxu0 %v569
        %583 = vmatpush.bf16.msra.mxu0 %v568
        %584 = vmatpush.bf16.msra.mxu0 %v567
        %585 = vmatpush.bf16.msra.mxu0 %v566
        %586 = vmatpush.bf16.msra.mxu0 %v565
        %587 = vmatpush.bf16.msra.mxu0 %v564
        %588 = vmatmul.bf16.gmra.mxu0 %v500
        %v589 = vpop.f32.mrf.mxu0
        %v590 = vadd.f32 0.0, %v589
        %v591 = vpop.f32.mrf.mxu0
        %v592 = vadd.f32 0.0, %v591
        %593 = vmatmul.bf16.gmra.mxu0 %v501
        %v594 = vpop.f32.mrf.mxu0
        %v595 = vadd.f32 0.0, %v594
        %v596 = vpop.f32.mrf.mxu0
        %v597 = vadd.f32 0.0, %v596
        %598 = vmatmul.bf16.gmra.mxu0 %v502
        %v599 = vpop.f32.mrf.mxu0
        %v600 = vadd.f32 0.0, %v599
        %v601 = vpop.f32.mrf.mxu0
        %v602 = vadd.f32 0.0, %v601
        %603 = vmatmul.bf16.gmra.mxu0 %v503
        %v604 = vpop.f32.mrf.mxu0
        %v605 = vadd.f32 0.0, %v604
        %v606 = vpop.f32.mrf.mxu0
        %v607 = vadd.f32 0.0, %v606
        %608 = vmatmul.bf16.gmra.mxu0 %v504
        %v609 = vpop.f32.mrf.mxu0
        %v610 = vadd.f32 0.0, %v609
        %v611 = vpop.f32.mrf.mxu0
        %v612 = vadd.f32 0.0, %v611
        %613 = vmatmul.bf16.gmra.mxu0 %v505
        %v614 = vpop.f32.mrf.mxu0
        %v615 = vadd.f32 0.0, %v614
        %v616 = vpop.f32.mrf.mxu0
        %v617 = vadd.f32 0.0, %v616
        %618 = vmatmul.bf16.gmra.mxu0 %v506
        %v619 = vpop.f32.mrf.mxu0
        %v620 = vadd.f32 0.0, %v619
        %v621 = vpop.f32.mrf.mxu0
        %v622 = vadd.f32 0.0, %v621
        %623 = vmatmul.bf16.gmra.mxu0 %v507
        %v624 = vpop.f32.mrf.mxu0
        %v625 = vadd.f32 0.0, %v624
        %v626 = vpop.f32.mrf.mxu0
        %v627 = vadd.f32 0.0, %v626
        %628 = vmatmul.bf16.gmra.mxu0 %v508
        %v629 = vpop.f32.mrf.mxu0
        %v630 = vadd.f32 0.0, %v629
        %v631 = vpop.f32.mrf.mxu0
        %v632 = vadd.f32 0.0, %v631
        %633 = vmatmul.bf16.gmra.mxu0 %v509
        %v634 = vpop.f32.mrf.mxu0
        %v635 = vadd.f32 0.0, %v634
        %v636 = vpop.f32.mrf.mxu0
        %v637 = vadd.f32 0.0, %v636
        %638 = vmatmul.bf16.gmra.mxu0 %v510
        %v639 = vpop.f32.mrf.mxu0
        %v640 = vadd.f32 0.0, %v639
        %v641 = vpop.f32.mrf.mxu0
        %v642 = vadd.f32 0.0, %v641
        %643 = vmatmul.bf16.gmra.mxu0 %v511
        %v644 = vpop.f32.mrf.mxu0
        %v645 = vadd.f32 0.0, %v644
        %v646 = vpop.f32.mrf.mxu0
        %v647 = vadd.f32 0.0, %v646
        %648 = vmatmul.bf16.gmra.mxu0 %v512
        %v649 = vpop.f32.mrf.mxu0
        %v650 = vadd.f32 0.0, %v649
        %v651 = vpop.f32.mrf.mxu0
        %v652 = vadd.f32 0.0, %v651
        %653 = vmatmul.bf16.gmra.mxu0 %v513
        %v654 = vpop.f32.mrf.mxu0
        %v655 = vadd.f32 0.0, %v654
        %v656 = vpop.f32.mrf.mxu0
        %v657 = vadd.f32 0.0, %v656
        %658 = vmatmul.bf16.gmra.mxu0 %v514
        %v659 = vpop.f32.mrf.mxu0
        %v660 = vadd.f32 0.0, %v659
        %v661 = vpop.f32.mrf.mxu0
        %v662 = vadd.f32 0.0, %v661
        %663 = vmatmul.bf16.gmra.mxu0 %v515
        %v664 = vpop.f32.mrf.mxu0
        %v665 = vadd.f32 0.0, %v664
        %v666 = vpop.f32.mrf.mxu0
        %v667 = vadd.f32 0.0, %v666
        %668 = vdwg.mxu0
        %v701 = vunpack.c.l.b16 %v324
        %v702 = vunpack.c.h.b16 %v324
        %v703 = vunpack.c.l.b16 %v325
        %v704 = vunpack.c.h.b16 %v325
        %v705 = vunpack.c.l.b16 %v326
        %v706 = vunpack.c.h.b16 %v326
        %v707 = vunpack.c.l.b16 %v327
        %v708 = vunpack.c.h.b16 %v327
        %v709 = vunpack.c.l.b16 %v328
        %v710 = vunpack.c.h.b16 %v328
        %v711 = vunpack.c.l.b16 %v329
        %v712 = vunpack.c.h.b16 %v329
        %v713 = vunpack.c.l.b16 %v330
        %v714 = vunpack.c.h.b16 %v330
        %v715 = vunpack.c.l.b16 %v331
        %v716 = vunpack.c.h.b16 %v331
        %v717 = vunpack.c.l.b16 %v332
        %v718 = vunpack.c.h.b16 %v332
        %v719 = vunpack.c.l.b16 %v333
        %v720 = vunpack.c.h.b16 %v333
        %v721 = vunpack.c.l.b16 %v334
        %v722 = vunpack.c.h.b16 %v334
        %v723 = vunpack.c.l.b16 %v335
        %v724 = vunpack.c.h.b16 %v335
        %v725 = vunpack.c.l.b16 %v336
        %v726 = vunpack.c.h.b16 %v336
        %v727 = vunpack.c.l.b16 %v337
        %v728 = vunpack.c.h.b16 %v337
        %v729 = vunpack.c.l.b16 %v338
        %v730 = vunpack.c.h.b16 %v338
        %v731 = vunpack.c.l.b16 %v339
        %v732 = vunpack.c.h.b16 %v339
        %v733 = vunpack.c.l.b16 %v340
        %v734 = vunpack.c.h.b16 %v340
        %v735 = vunpack.c.l.b16 %v341
        %v736 = vunpack.c.h.b16 %v341
        %v737 = vunpack.c.l.b16 %v342
        %v738 = vunpack.c.h.b16 %v342
        %v739 = vunpack.c.l.b16 %v343
        %v740 = vunpack.c.h.b16 %v343
        %v741 = vunpack.c.l.b16 %v344
        %v742 = vunpack.c.h.b16 %v344
        %v743 = vunpack.c.l.b16 %v345
        %v744 = vunpack.c.h.b16 %v345
        %v745 = vunpack.c.l.b16 %v346
        %v746 = vunpack.c.h.b16 %v346
        %v747 = vunpack.c.l.b16 %v347
        %v748 = vunpack.c.h.b16 %v347
        %v749 = vunpack.c.l.b16 %v348
        %v750 = vunpack.c.h.b16 %v348
        %v751 = vunpack.c.l.b16 %v349
        %v752 = vunpack.c.h.b16 %v349
        %v753 = vunpack.c.l.b16 %v350
        %v754 = vunpack.c.h.b16 %v350
        %v755 = vunpack.c.l.b16 %v351
        %v756 = vunpack.c.h.b16 %v351
        %v757 = vunpack.c.l.b16 %v352
        %v758 = vunpack.c.h.b16 %v352
        %v759 = vunpack.c.l.b16 %v353
        %v760 = vunpack.c.h.b16 %v353
        %v761 = vunpack.c.l.b16 %v354
        %v762 = vunpack.c.h.b16 %v354
        %v763 = vunpack.c.l.b16 %v355
        %v764 = vunpack.c.h.b16 %v355
        %v765 = vpack.c.b16 %v703, %v701
        %v766 = vpack.c.b16 %v704, %v702
        %v767 = vpack.c.b16 %v707, %v705
        %v768 = vpack.c.b16 %v708, %v706
        %v769 = vpack.c.b16 %v711, %v709
        %v770 = vpack.c.b16 %v712, %v710
        %v771 = vpack.c.b16 %v715, %v713
        %v772 = vpack.c.b16 %v716, %v714
        %v773 = vpack.c.b16 %v719, %v717
        %v774 = vpack.c.b16 %v720, %v718
        %v775 = vpack.c.b16 %v723, %v721
        %v776 = vpack.c.b16 %v724, %v722
        %v777 = vpack.c.b16 %v727, %v725
        %v778 = vpack.c.b16 %v728, %v726
        %v779 = vpack.c.b16 %v731, %v729
        %v780 = vpack.c.b16 %v732, %v730
        %v781 = vpack.c.b16 %v735, %v733
        %v782 = vpack.c.b16 %v736, %v734
        %v783 = vpack.c.b16 %v739, %v737
        %v784 = vpack.c.b16 %v740, %v738
        %v785 = vpack.c.b16 %v743, %v741
        %v786 = vpack.c.b16 %v744, %v742
        %v787 = vpack.c.b16 %v747, %v745
        %v788 = vpack.c.b16 %v748, %v746
        %v789 = vpack.c.b16 %v751, %v749
        %v790 = vpack.c.b16 %v752, %v750
        %v791 = vpack.c.b16 %v755, %v753
        %v792 = vpack.c.b16 %v756, %v754
        %v793 = vpack.c.b16 %v759, %v757
        %v794 = vpack.c.b16 %v760, %v758
        %v795 = vpack.c.b16 %v763, %v761
        %v796 = vpack.c.b16 %v764, %v762
        %v861 = vunpack.c.l.b16 %v356
        %v862 = vunpack.c.l.b16 %v357
        %v863 = vunpack.c.l.b16 %v358
        %v864 = vunpack.c.l.b16 %v359
        %v865 = vunpack.c.l.b16 %v360
        %v866 = vunpack.c.l.b16 %v361
        %v867 = vunpack.c.l.b16 %v362
        %v868 = vunpack.c.l.b16 %v363
        %v869 = vunpack.c.l.b16 %v364
        %v870 = vunpack.c.l.b16 %v365
        %v871 = vunpack.c.l.b16 %v366
        %v872 = vunpack.c.l.b16 %v367
        %v873 = vunpack.c.l.b16 %v368
        %v874 = vunpack.c.l.b16 %v369
        %v875 = vunpack.c.l.b16 %v370
        %v876 = vunpack.c.l.b16 %v371
        %v877 = vunpack.c.l.b16 %v372
        %v878 = vunpack.c.l.b16 %v373
        %v879 = vunpack.c.l.b16 %v374
        %v880 = vunpack.c.l.b16 %v375
        %v881 = vunpack.c.l.b16 %v376
        %v882 = vunpack.c.l.b16 %v377
        %v883 = vunpack.c.l.b16 %v378
        %v884 = vunpack.c.l.b16 %v379
        %v885 = vunpack.c.l.b16 %v380
        %v886 = vunpack.c.l.b16 %v381
        %v887 = vunpack.c.l.b16 %v382
        %v888 = vunpack.c.l.b16 %v383
        %v889 = vunpack.c.l.b16 %v384
        %v890 = vunpack.c.l.b16 %v385
        %v891 = vunpack.c.l.b16 %v386
        %v892 = vunpack.c.l.b16 %v387
        %v893 = vpack.c.b16 %v862, %v861
        %v894 = vpack.c.b16 %v864, %v863
        %v895 = vpack.c.b16 %v866, %v865
        %v896 = vpack.c.b16 %v868, %v867
        %v897 = vpack.c.b16 %v870, %v869
        %v898 = vpack.c.b16 %v872, %v871
        %v899 = vpack.c.b16 %v874, %v873
        %v900 = vpack.c.b16 %v876, %v875
        %v901 = vpack.c.b16 %v878, %v877
        %v902 = vpack.c.b16 %v880, %v879
        %v903 = vpack.c.b16 %v882, %v881
        %v904 = vpack.c.b16 %v884, %v883
        %v905 = vpack.c.b16 %v886, %v885
        %v906 = vpack.c.b16 %v888, %v887
        %v907 = vpack.c.b16 %v890, %v889
        %v908 = vpack.c.b16 %v892, %v891
        %925 = vmatpush.bf16.msra.mxu0 %v900
        %926 = vmatpush.bf16.msra.mxu0 %v899
        %927 = vmatpush.bf16.msra.mxu0 %v898
        %928 = vmatpush.bf16.msra.mxu0 %v897
        %929 = vmatpush.bf16.msra.mxu0 %v896
        %930 = vmatpush.bf16.msra.mxu0 %v895
        %931 = vmatpush.bf16.msra.mxu0 %v894
        %932 = vmatpush.bf16.msra.mxu0 %v893
        %933 = vmatmul.bf16.gmra.mxu0 %v765
        %v934 = vpop.f32.mrf.mxu0
        %v935 = vadd.f32 %v590, %v934
        %v936 = vpop.f32.mrf.mxu0
        %v937 = vadd.f32 %v592, %v936
        %938 = vmatmul.bf16.gmra.mxu0 %v767
        %v939 = vpop.f32.mrf.mxu0
        %v940 = vadd.f32 %v595, %v939
        %v941 = vpop.f32.mrf.mxu0
        %v942 = vadd.f32 %v597, %v941
        %943 = vmatmul.bf16.gmra.mxu0 %v769
        %v944 = vpop.f32.mrf.mxu0
        %v945 = vadd.f32 %v600, %v944
        %v946 = vpop.f32.mrf.mxu0
        %v947 = vadd.f32 %v602, %v946
        %948 = vmatmul.bf16.gmra.mxu0 %v771
        %v949 = vpop.f32.mrf.mxu0
        %v950 = vadd.f32 %v605, %v949
        %v951 = vpop.f32.mrf.mxu0
        %v952 = vadd.f32 %v607, %v951
        %953 = vmatmul.bf16.gmra.mxu0 %v773
        %v954 = vpop.f32.mrf.mxu0
        %v955 = vadd.f32 %v610, %v954
        %v956 = vpop.f32.mrf.mxu0
        %v957 = vadd.f32 %v612, %v956
        %958 = vmatmul.bf16.gmra.mxu0 %v775
        %v959 = vpop.f32.mrf.mxu0
        %v960 = vadd.f32 %v615, %v959
        %v961 = vpop.f32.mrf.mxu0
        %v962 = vadd.f32 %v617, %v961
        %963 = vmatmul.bf16.gmra.mxu0 %v777
        %v964 = vpop.f32.mrf.mxu0
        %v965 = vadd.f32 %v620, %v964
        %v966 = vpop.f32.mrf.mxu0
        %v967 = vadd.f32 %v622, %v966
        %968 = vmatmul.bf16.gmra.mxu0 %v779
        %v969 = vpop.f32.mrf.mxu0
        %v970 = vadd.f32 %v625, %v969
        %v971 = vpop.f32.mrf.mxu0
        %v972 = vadd.f32 %v627, %v971
        %973 = vmatmul.bf16.gmra.mxu0 %v781
        %v974 = vpop.f32.mrf.mxu0
        %v975 = vadd.f32 %v630, %v974
        %v976 = vpop.f32.mrf.mxu0
        %v977 = vadd.f32 %v632, %v976
        %978 = vmatmul.bf16.gmra.mxu0 %v783
        %v979 = vpop.f32.mrf.mxu0
        %v980 = vadd.f32 %v635, %v979
        %v981 = vpop.f32.mrf.mxu0
        %v982 = vadd.f32 %v637, %v981
        %983 = vmatmul.bf16.gmra.mxu0 %v785
        %v984 = vpop.f32.mrf.mxu0
        %v985 = vadd.f32 %v640, %v984
        %v986 = vpop.f32.mrf.mxu0
        %v987 = vadd.f32 %v642, %v986
        %988 = vmatmul.bf16.gmra.mxu0 %v787
        %v989 = vpop.f32.mrf.mxu0
        %v990 = vadd.f32 %v645, %v989
        %v991 = vpop.f32.mrf.mxu0
        %v992 = vadd.f32 %v647, %v991
        %993 = vmatmul.bf16.gmra.mxu0 %v789
        %v994 = vpop.f32.mrf.mxu0
        %v995 = vadd.f32 %v650, %v994
        %v996 = vpop.f32.mrf.mxu0
        %v997 = vadd.f32 %v652, %v996
        %998 = vmatmul.bf16.gmra.mxu0 %v791
        %v999 = vpop.f32.mrf.mxu0
        %v1000 = vadd.f32 %v655, %v999
        %v1001 = vpop.f32.mrf.mxu0
        %v1002 = vadd.f32 %v657, %v1001
        %1003 = vmatmul.bf16.gmra.mxu0 %v793
        %v1004 = vpop.f32.mrf.mxu0
        %v1005 = vadd.f32 %v660, %v1004
        %v1006 = vpop.f32.mrf.mxu0
        %v1007 = vadd.f32 %v662, %v1006
        %1008 = vmatmul.bf16.gmra.mxu0 %v795
        %v1009 = vpop.f32.mrf.mxu0
        %v1010 = vadd.f32 %v665, %v1009
        %v1011 = vpop.f32.mrf.mxu0
        %v1012 = vadd.f32 %v667, %v1011
        %1013 = vdwg.mxu0
        %1014 = vmatpush.bf16.msra.mxu0 %v908
        %1015 = vmatpush.bf16.msra.mxu0 %v907
        %1016 = vmatpush.bf16.msra.mxu0 %v906
        %1017 = vmatpush.bf16.msra.mxu0 %v905
        %1018 = vmatpush.bf16.msra.mxu0 %v904
        %1019 = vmatpush.bf16.msra.mxu0 %v903
        %1020 = vmatpush.bf16.msra.mxu0 %v902
        %1021 = vmatpush.bf16.msra.mxu0 %v901
        %1022 = vmatmul.bf16.gmra.mxu0 %v766
        %v1023 = vpop.f32.mrf.mxu0
        %v1024 = vadd.f32 %v935, %v1023
        %v1025 = vpop.f32.mrf.mxu0
        %v1026 = vadd.f32 %v937, %v1025
        %1027 = vmatmul.bf16.gmra.mxu0 %v768
        %v1028 = vpop.f32.mrf.mxu0
        %v1029 = vadd.f32 %v940, %v1028
        %v1030 = vpop.f32.mrf.mxu0
        %v1031 = vadd.f32 %v942, %v1030
        %1032 = vmatmul.bf16.gmra.mxu0 %v770
        %v1033 = vpop.f32.mrf.mxu0
        %v1034 = vadd.f32 %v945, %v1033
        %v1035 = vpop.f32.mrf.mxu0
        %v1036 = vadd.f32 %v947, %v1035
        %1037 = vmatmul.bf16.gmra.mxu0 %v772
        %v1038 = vpop.f32.mrf.mxu0
        %v1039 = vadd.f32 %v950, %v1038
        %v1040 = vpop.f32.mrf.mxu0
        %v1041 = vadd.f32 %v952, %v1040
        %1042 = vmatmul.bf16.gmra.mxu0 %v774
        %v1043 = vpop.f32.mrf.mxu0
        %v1044 = vadd.f32 %v955, %v1043
        %v1045 = vpop.f32.mrf.mxu0
        %v1046 = vadd.f32 %v957, %v1045
        %1047 = vmatmul.bf16.gmra.mxu0 %v776
        %v1048 = vpop.f32.mrf.mxu0
        %v1049 = vadd.f32 %v960, %v1048
        %v1050 = vpop.f32.mrf.mxu0
        %v1051 = vadd.f32 %v962, %v1050
        %1052 = vmatmul.bf16.gmra.mxu0 %v778
        %v1053 = vpop.f32.mrf.mxu0
        %v1054 = vadd.f32 %v965, %v1053
        %v1055 = vpop.f32.mrf.mxu0
        %v1056 = vadd.f32 %v967, %v1055
        %1057 = vmatmul.bf16.gmra.mxu0 %v780
        %v1058 = vpop.f32.mrf.mxu0
        %v1059 = vadd.f32 %v970, %v1058
        %v1060 = vpop.f32.mrf.mxu0
        %v1061 = vadd.f32 %v972, %v1060
        %1062 = vmatmul.bf16.gmra.mxu0 %v782
        %v1063 = vpop.f32.mrf.mxu0
        %v1064 = vadd.f32 %v975, %v1063
        %v1065 = vpop.f32.mrf.mxu0
        %v1066 = vadd.f32 %v977, %v1065
        %1067 = vmatmul.bf16.gmra.mxu0 %v784
        %v1068 = vpop.f32.mrf.mxu0
        %v1069 = vadd.f32 %v980, %v1068
        %v1070 = vpop.f32.mrf.mxu0
        %v1071 = vadd.f32 %v982, %v1070
        %1072 = vmatmul.bf16.gmra.mxu0 %v786
        %v1073 = vpop.f32.mrf.mxu0
        %v1074 = vadd.f32 %v985, %v1073
        %v1075 = vpop.f32.mrf.mxu0
        %v1076 = vadd.f32 %v987, %v1075
        %1077 = vmatmul.bf16.gmra.mxu0 %v788
        %v1078 = vpop.f32.mrf.mxu0
        %v1079 = vadd.f32 %v990, %v1078
        %v1080 = vpop.f32.mrf.mxu0
        %v1081 = vadd.f32 %v992, %v1080
        %1082 = vmatmul.bf16.gmra.mxu0 %v790
        %v1083 = vpop.f32.mrf.mxu0
        %v1084 = vadd.f32 %v995, %v1083
        %v1085 = vpop.f32.mrf.mxu0
        %v1086 = vadd.f32 %v997, %v1085
        %1087 = vmatmul.bf16.gmra.mxu0 %v792
        %v1088 = vpop.f32.mrf.mxu0
        %v1089 = vadd.f32 %v1000, %v1088
        %v1090 = vpop.f32.mrf.mxu0
        %v1091 = vadd.f32 %v1002, %v1090
        %1092 = vmatmul.bf16.gmra.mxu0 %v794
        %v1093 = vpop.f32.mrf.mxu0
        %v1094 = vadd.f32 %v1005, %v1093
        %v1095 = vpop.f32.mrf.mxu0
        %v1096 = vadd.f32 %v1007, %v1095
        %1097 = vmatmul.bf16.gmra.mxu0 %v796
        %v1098 = vpop.f32.mrf.mxu0
        %v1099 = vadd.f32 %v1010, %v1098
        %v1100 = vpop.f32.mrf.mxu0
        %v1101 = vadd.f32 %v1012, %v1100
        %1102 = vdwg.mxu0
        %v1103 = vld [vmem:[%s4] sm:$0x1]
        %v1105 = vperm.slane %v1103, 0
        %v1107 = vadd.f32 %v1024, %v1105
        %v1108 = vadd.f32 %v1026, %v1105
        %v1109 = vadd.f32 %v1029, %v1105
        %v1110 = vadd.f32 %v1031, %v1105
        %v1111 = vadd.f32 %v1034, %v1105
        %v1112 = vadd.f32 %v1036, %v1105
        %v1113 = vadd.f32 %v1039, %v1105
        %v1114 = vadd.f32 %v1041, %v1105
        %v1115 = vadd.f32 %v1044, %v1105
        %v1116 = vadd.f32 %v1046, %v1105
        %v1117 = vadd.f32 %v1049, %v1105
        %v1118 = vadd.f32 %v1051, %v1105
        %v1119 = vadd.f32 %v1054, %v1105
        %v1120 = vadd.f32 %v1056, %v1105
        %v1121 = vadd.f32 %v1059, %v1105
        %v1122 = vadd.f32 %v1061, %v1105
        %v1123 = vadd.f32 %v1064, %v1105
        %v1124 = vadd.f32 %v1066, %v1105
        %v1125 = vadd.f32 %v1069, %v1105
        %v1126 = vadd.f32 %v1071, %v1105
        %v1127 = vadd.f32 %v1074, %v1105
        %v1128 = vadd.f32 %v1076, %v1105
        %v1129 = vadd.f32 %v1079, %v1105
        %v1130 = vadd.f32 %v1081, %v1105
        %v1131 = vadd.f32 %v1084, %v1105
        %v1132 = vadd.f32 %v1086, %v1105
        %v1133 = vadd.f32 %v1089, %v1105
        %v1134 = vadd.f32 %v1091, %v1105
        %v1135 = vadd.f32 %v1094, %v1105
        %v1136 = vadd.f32 %v1096, %v1105
        %v1137 = vadd.f32 %v1099, %v1105
        %v1138 = vadd.f32 %v1101, %v1105
        %1139 = vst [vmem:[%s320] sm:$0xff] %v1107
        %1140 = vst [vmem:[%s320 + $0x8] sm:$0xff] %v1108
        %1141 = vst [vmem:[%s320 + $0x10] sm:$0xff] %v1109
        %1142 = vst [vmem:[%s320 + $0x18] sm:$0xff] %v1110
        %1143 = vst [vmem:[%s320 + $0x20] sm:$0xff] %v1111
        %1144 = vst [vmem:[%s320 + $0x28] sm:$0xff] %v1112
        %1145 = vst [vmem:[%s320 + $0x30] sm:$0xff] %v1113
        %1146 = vst [vmem:[%s320 + $0x38] sm:$0xff] %v1114
        %1147 = vst [vmem:[%s320 + $0x40] sm:$0xff] %v1115
        %1148 = vst [vmem:[%s320 + $0x48] sm:$0xff] %v1116
        %1149 = vst [vmem:[%s320 + $0x50] sm:$0xff] %v1117
        %1150 = vst [vmem:[%s320 + $0x58] sm:$0xff] %v1118
        %1151 = vst [vmem:[%s320 + $0x60] sm:$0xff] %v1119
        %1152 = vst [vmem:[%s320 + $0x68] sm:$0xff] %v1120
        %1153 = vst [vmem:[%s320 + $0x70] sm:$0xff] %v1121
        %1154 = vst [vmem:[%s320 + $0x78] sm:$0xff] %v1122
        %1155 = vst [vmem:[%s320 + $0x80] sm:$0xff] %v1123
        %1156 = vst [vmem:[%s320 + $0x88] sm:$0xff] %v1124
        %1157 = vst [vmem:[%s320 + $0x90] sm:$0xff] %v1125
        %1158 = vst [vmem:[%s320 + $0x98] sm:$0xff] %v1126
        %1159 = vst [vmem:[%s320 + $0xa0] sm:$0xff] %v1127
        %1160 = vst [vmem:[%s320 + $0xa8] sm:$0xff] %v1128
        %1161 = vst [vmem:[%s320 + $0xb0] sm:$0xff] %v1129
        %1162 = vst [vmem:[%s320 + $0xb8] sm:$0xff] %v1130
        %1163 = vst [vmem:[%s320 + $0xc0] sm:$0xff] %v1131
        %1164 = vst [vmem:[%s320 + $0xc8] sm:$0xff] %v1132
        %1165 = vst [vmem:[%s320 + $0xd0] sm:$0xff] %v1133
        %1166 = vst [vmem:[%s320 + $0xd8] sm:$0xff] %v1134
        %1167 = vst [vmem:[%s320 + $0xe0] sm:$0xff] %v1135
        %1168 = vst [vmem:[%s320 + $0xe8] sm:$0xff] %v1136
        %1169 = vst [vmem:[%s320 + $0xf0] sm:$0xff] %v1137
        %1170 = vst [vmem:[%s320 + $0xf8] sm:$0xff] %v1138
        %s1171 = sand.u32 %s149, 1
        %s1172 = scalar_lea.sflag [#allocation4], %s1171
        %s1173 = sand.u32 %s149, 1
        %s1174 = smul.addr %s1173, 256
        %s1175 = scalar_lea.vmem [#allocation10], %s1174
        // Predicated region
        $region57: #{tpu_custom_call.1} parent=39 // pred_check
          %p1176 = pneg %p159
        $region58: #{tpu_custom_call.1} parent=39 // pred_check_branch
          %1178 = sbr.rel (%p1176) target = $region60
        $region59: #{tpu_custom_call.1} parent=39 // pred_region
          %s1179 = smul.u32 32, %s26
          %1181 = vsyncadd %s1172, 0
          %s1182 = smul.addr %s1179, 8
          %s1183 = scalar_lea.hbm %s5, %s1182
          %s1184 = sshll.u32 %s1175, 4
          %s1185 = int_to_ptr.vmem [resolvable:$true] %s1184
          %s1186 = sshll.u32 %s1183, 4
          %s1187 = int_to_ptr.hbm [resolvable:$true] %s1186
          %1192 = dma.vmem_to_hbm [thread:$0]  %s1185, 4096, %s1187, %s1172, 128, 128, 8
        $region60: #{tpu_custom_call.1} parent=39 // pred_fallthru
          _
      $region40: #{tpu_custom_call.1} parent=5 // pred_fallthru
        _
      %p1193 = scmp.le.s32.totalorder 2, %s21
      // Predicated region
      $region61: #{tpu_custom_call.1} parent=5 // pred_check
        %p1194 = pneg %p1193
      $region62: #{tpu_custom_call.1} parent=5 // pred_check_branch
        %1196 = sbr.rel (%p1194) target = $region64
      $region63: #{tpu_custom_call.1} parent=5 // pred_region
        %s1197 = ssub.s32 %s21, 2
        // Predicated region
        $region65: #{tpu_custom_call.1} parent=63 // pred_check
          %p1198 = pneg %p165
        $region66: #{tpu_custom_call.1} parent=63 // pred_check_branch
          %1200 = sbr.rel (%p1198) target = $region68
        $region67: #{tpu_custom_call.1} parent=63 // pred_region
          %s1201 = sand.u32 %s150, 1
          %s1202 = scalar_lea.sflag [#allocation4], %s1201
          %s1203 = sand.u32 %s150, 1
          %s1204 = smul.addr %s1203, 256
          %s1205 = scalar_lea.vmem [#allocation10], %s1204
          %1207 = dma.done %s1202, 4096
        $region68: #{tpu_custom_call.1} parent=63 // pred_fallthru
          _
      $region64: #{tpu_custom_call.1} parent=5 // pred_fallthru
        _
    $region6: #{tpu_custom_call.1} parent=1 // loop_footer
      %s25 = sadd.s32 1, %s21
    $region7: #{tpu_custom_call.1} parent=1 // loop_footer_branch
      %20 = sbr.rel target = $region3
    $region8: #{tpu_custom_call.1} parent=1 // loop_exit
      _
    %1208 = vsyncpa [#allocation3], 1
    %s1209 = scalar_lea.sflag [#allocation3], 1
    %1210 = vsyncpa %s1209, 1
    %1211 = vsyncpa [#allocation6], 1
    %s1212 = scalar_lea.sflag [#allocation6], 1
    %1213 = vsyncpa %s1212, 1
    %1214 = vsyncpa [#allocation9], 1
    %1215 = vsyncpa [#allocation4], 1
    %s1216 = scalar_lea.sflag [#allocation4], 1
    %1217 = vsyncpa %s1216, 1

</llo_original>
